<compile_context>
chip_gen: v6e
topology: v6e:2x2x1
jax: 0.10.0
libtpu: 0.0.40
codegen_flags: <defaults>
</compile_context>

<pallas_src>
from functools import partial

import jax
import jax.numpy as jnp
from jax.experimental import pallas as pl
from jax.experimental.pallas import tpu as pltpu

_LANES = 128
_ROW_CAP = 1024  # max sublane rows per tile -> 128K samples / ~2 MiB I/O per grid step


def rbfn_kernel(x_ref, c_ref, nir2_ref, w_ref, b_ref, o_ref):
    # x_ref   : (F, r_tile, 128)  batch tile, dense on sublanes + lanes
    # c_ref   : (F, N, 1, 1)      centres, one (N,1,1) column per feature
    # nir2_ref: (N, 1, 1)         -1 / radii^2   (precomputed in wrapper)
    # w_ref   : (O, N, 1, 1)      linear weight rows
    # b_ref   : (O, 1, 1)         linear bias
    # o_ref   : (O, r_tile, 128)
    n_features = c_ref.shape[0]
    n_out = w_ref.shape[0]

    # Pairwise squared distances (N, r_tile, 128): unrolled over the tiny
    # feature dim, pure VPU broadcast ops (no K=2 MXU push/pop overhead).
    d2 = None
    for f in range(n_features):
        diff = x_ref[f] - c_ref[f]            # (rt,128) - (N,1,1) -> (N,rt,128)
        sq = diff * diff
        d2 = sq if d2 is None else d2 + sq

    # RBF activation: exp(-(sqrt(d2)/r)^2) == exp(d2 * (-1/r^2))  (EUP exp, no divide)
    phi = jnp.exp(d2 * nir2_ref[...])         # (N, rt, 128), full vregs

    # Linear + sigmoid, one dense (rt,128) row per output; no concatenate.
    for o in range(n_out):
        logits = jnp.sum(phi * w_ref[o], axis=0) + b_ref[o]   # (rt, 128)
        # sigmoid(x) = 0.5 * (tanh(x/2) + 1): single EUP transcendental.
        o_ref[o] = (0.5 * (jnp.tanh(0.5 * logits) + 1.0)).astype(o_ref.dtype)


def _choose_rows(batch, block_rows):
    """Pick sublane-row tile size (multiple of 8) and number of grid steps."""
    r_needed = pl.cdiv(batch, _LANES)
    if block_rows is not None:
        r_tile = max(8, pl.cdiv(int(block_rows), 8) * 8)
    else:
        r_pad8 = pl.cdiv(r_needed, 8) * 8
        if r_pad8 <= 16:
            # Tiny batch: one small tile; splitting only adds per-step overhead.
            r_tile = r_pad8
        else:
            # Keep >= 2 grid steps (dual-TC sharding on v7x), cap per-tile rows
            # at _ROW_CAP (128K samples, ~20 MiB peak VMEM incl. double buffers).
            r_tile = min(_ROW_CAP, pl.cdiv(r_pad8, 2))
            r_tile = pl.cdiv(r_tile, 8) * 8
    n_tiles = max(1, pl.cdiv(r_needed, r_tile))
    return int(r_tile), int(n_tiles)


@partial(jax.jit, static_argnames=("block_rows",))
def rbfn_forward(x, centres, radii, weight, bias, *, block_rows=None):
    """x: (B, in_features) f32. Returns (B, out_features) f32."""
    B, F = x.shape
    N = centres.shape[0]
    O = weight.shape[0]                       # nn.Linear weight is (out, in)

    r_tile, n_tiles = _choose_rows(B, block_rows)
    R = r_tile * n_tiles
    b_pad = R * _LANES

    # Layout plumbing / constant hoisting (outside the hot loop). jit lets XLA
    # fuse the pad/transpose/reshape into as few HBM passes as possible.
    # TODO(synk): a caller that already holds x in (F, R, 128) layout could skip this pack/unpack.
    xp = jnp.pad(x.astype(jnp.float32), ((0, b_pad - B), (0, 0)))          # (Bp, F)
    x_pack = xp.T.reshape(F, R, _LANES)                                    # (F, R, 128)
    c_pack = centres.astype(jnp.float32).T.reshape(F, N, 1, 1)             # (F, N, 1, 1)
    neg_inv_r2 = (-1.0 / (radii.astype(jnp.float32) ** 2)).reshape(N, 1, 1)
    w_pack = weight.astype(jnp.float32).reshape(O, N, 1, 1)                # (O, N, 1, 1)
    b_pack = bias.astype(jnp.float32).reshape(O, 1, 1)                     # (O, 1, 1)

    out_pack = pl.pallas_call(
        rbfn_kernel,
        out_shape=jax.ShapeDtypeStruct((O, R, _LANES), jnp.float32),
        grid=(n_tiles,),
        in_specs=[
            pl.BlockSpec((F, r_tile, _LANES), lambda i: (0, i, 0)),  # x tile
            pl.BlockSpec((F, N, 1, 1), lambda i: (0, 0, 0, 0)),      # centres (replicated)
            pl.BlockSpec((N, 1, 1), lambda i: (0, 0, 0)),            # -1/r^2  (replicated)
            pl.BlockSpec((O, N, 1, 1), lambda i: (0, 0, 0, 0)),      # weight  (replicated)
            pl.BlockSpec((O, 1, 1), lambda i: (0, 0, 0)),            # bias    (replicated)
        ],
        out_specs=pl.BlockSpec((O, r_tile, _LANES), lambda i: (0, i, 0)),
        compiler_params=pltpu.CompilerParams(
            dimension_semantics=("parallel",),
            vmem_limit_bytes=48 * 1024 * 1024,
        ),
    )(x_pack, c_pack, neg_inv_r2, w_pack, b_pack)

    return out_pack.reshape(O, b_pad).T[:B]                                # (B, O)


def init_params(key, neurons=6, in_features=2, out_features=2):
    k_c, k_w, k_b = jax.random.split(key, 3)
    # RBFLayer: centres ~ N(0,1), radii = 1
    centres = jax.random.normal(k_c, (neurons, in_features), dtype=jnp.float32)
    radii = jnp.ones((neurons,), dtype=jnp.float32)
    # nn.Linear default init: U(-1/sqrt(fan_in), 1/sqrt(fan_in))
    bound = 1.0 / jnp.sqrt(float(neurons))
    weight = jax.random.uniform(k_w, (out_features, neurons), jnp.float32, -bound, bound)
    bias = jax.random.uniform(k_b, (out_features,), jnp.float32, -bound, bound)
    return centres, radii, weight, bias


def reference_forward(x, centres, radii, weight, bias):
    # Pure-JAX reference mirroring the PyTorch module literally.
    diff = x[:, None, :] - centres[None, :, :]               # (B, N, F)
    dist = jnp.sqrt(jnp.sum(diff * diff, axis=-1)) / radii[None, :]
    phi = jnp.exp(-(dist ** 2))
    logits = phi @ weight.T + bias
    return jax.nn.sigmoid(logits)


if __name__ == "__main__":
    key = jax.random.PRNGKey(0)
    k_params, k_x, k_x2 = jax.random.split(key, 3)

    neurons = 6
    centres, radii, weight, bias = init_params(k_params, neurons=neurons)

    # Small smoke test (single tile).
    B = 8
    x = jax.random.normal(k_x, (B, 2), dtype=jnp.float32)
    out = jax.block_until_ready(rbfn_forward(x, centres, radii, weight, bias))
    ref = reference_forward(x, centres, radii, weight, bias)
    assert out.shape == (B, 2)
    assert jnp.allclose(out, ref, atol=1e-5, rtol=1e-5), (out, ref)

    # Exercise the multi-tile grid path (batch padding + pipelined parallel tiles).
    B2 = 2000
    x2 = jax.random.normal(k_x2, (B2, 2), dtype=jnp.float32)
    out2 = jax.block_until_ready(
        rbfn_forward(x2, centres, radii, weight, bias, block_rows=8))
    ref2 = reference_forward(x2, centres, radii, weight, bias)
    assert out2.shape == (B2, 2)
    assert jnp.allclose(out2, ref2, atol=1e-5, rtol=1e-5)

    print("KERNEL_OK")
</pallas_src>

<mosaic_0001>
module attributes {stable_mosaic.version = 11 : i64} {
  func.func @rbfn_kernel(%arg0: i32, %arg1: memref<2x8x128xf32, #tpu.memory_space<vmem>>, %arg2: memref<2x6x1x1xf32, #tpu.memory_space<vmem>>, %arg3: memref<6x1x1xf32, #tpu.memory_space<vmem>>, %arg4: memref<2x6x1x1xf32, #tpu.memory_space<vmem>>, %arg5: memref<2x1x1xf32, #tpu.memory_space<vmem>>, %arg6: memref<2x8x128xf32, #tpu.memory_space<vmem>>) attributes {dimension_semantics = [#tpu.dimension_semantics<parallel>], iteration_bounds = array<i64: 1>, scalar_prefetch = 0 : i64, scratch_operands = 0 : i64, tpu.core_type = #tpu.core_type<tc>, window_params = [{transform_indices = @transform_0, window_bounds = array<i64: 2, 8, 128>}, {pipeline_mode = #tpu.pipeline_mode<synchronous>, transform_indices = @transform_1, window_bounds = array<i64: 2, 6, 1, 1>}, {pipeline_mode = #tpu.pipeline_mode<synchronous>, transform_indices = @transform_2, window_bounds = array<i64: 6, 1, 1>}, {pipeline_mode = #tpu.pipeline_mode<synchronous>, transform_indices = @transform_3, window_bounds = array<i64: 2, 6, 1, 1>}, {pipeline_mode = #tpu.pipeline_mode<synchronous>, transform_indices = @transform_4, window_bounds = array<i64: 2, 1, 1>}, {transform_indices = @transform_5, window_bounds = array<i64: 2, 8, 128>}]} {
    %c0 = arith.constant 0 : index
    %c0_0 = arith.constant 0 : index
    %c0_1 = arith.constant 0 : index
    %0 = vector.load %arg1[%c0, %c0_0, %c0_1] : memref<2x8x128xf32, #tpu.memory_space<vmem>>, vector<1x8x128xf32>
    %1 = vector.shape_cast %0 : vector<1x8x128xf32> to vector<8x128xf32>
    %c0_2 = arith.constant 0 : index
    %c0_3 = arith.constant 0 : index
    %c0_4 = arith.constant 0 : index
    %c0_5 = arith.constant 0 : index
    %2 = vector.load %arg2[%c0_2, %c0_3, %c0_4, %c0_5] : memref<2x6x1x1xf32, #tpu.memory_space<vmem>>, vector<1x6x1x1xf32>
    %3 = vector.shape_cast %2 : vector<1x6x1x1xf32> to vector<6x1x1xf32>
    %4 = vector.shape_cast %1 : vector<8x128xf32> to vector<1x8x128xf32>
    %5 = vector.broadcast %4 : vector<1x8x128xf32> to vector<6x8x128xf32>
    %6 = vector.broadcast %3 : vector<6x1x1xf32> to vector<6x8x128xf32>
    %7 = arith.subf %5, %6 : vector<6x8x128xf32>
    %8 = arith.mulf %7, %7 : vector<6x8x128xf32>
    %c1 = arith.constant 1 : index
    %c0_6 = arith.constant 0 : index
    %c0_7 = arith.constant 0 : index
    %9 = vector.load %arg1[%c1, %c0_6, %c0_7] : memref<2x8x128xf32, #tpu.memory_space<vmem>>, vector<1x8x128xf32>
    %10 = vector.shape_cast %9 : vector<1x8x128xf32> to vector<8x128xf32>
    %c1_8 = arith.constant 1 : index
    %c0_9 = arith.constant 0 : index
    %c0_10 = arith.constant 0 : index
    %c0_11 = arith.constant 0 : index
    %11 = vector.load %arg2[%c1_8, %c0_9, %c0_10, %c0_11] : memref<2x6x1x1xf32, #tpu.memory_space<vmem>>, vector<1x6x1x1xf32>
    %12 = vector.shape_cast %11 : vector<1x6x1x1xf32> to vector<6x1x1xf32>
    %13 = vector.shape_cast %10 : vector<8x128xf32> to vector<1x8x128xf32>
    %14 = vector.broadcast %13 : vector<1x8x128xf32> to vector<6x8x128xf32>
    %15 = vector.broadcast %12 : vector<6x1x1xf32> to vector<6x8x128xf32>
    %16 = arith.subf %14, %15 : vector<6x8x128xf32>
    %17 = arith.mulf %16, %16 : vector<6x8x128xf32>
    %18 = arith.addf %8, %17 : vector<6x8x128xf32>
    %c0_12 = arith.constant 0 : index
    %c0_13 = arith.constant 0 : index
    %c0_14 = arith.constant 0 : index
    %19 = vector.load %arg3[%c0_12, %c0_13, %c0_14] : memref<6x1x1xf32, #tpu.memory_space<vmem>>, vector<6x1x1xf32>
    %20 = vector.broadcast %19 : vector<6x1x1xf32> to vector<6x8x128xf32>
    %21 = arith.mulf %18, %20 : vector<6x8x128xf32>
    %22 = math.exp %21 : vector<6x8x128xf32>
    %c0_15 = arith.constant 0 : index
    %c0_16 = arith.constant 0 : index
    %c0_17 = arith.constant 0 : index
    %c0_18 = arith.constant 0 : index
    %23 = vector.load %arg4[%c0_15, %c0_16, %c0_17, %c0_18] : memref<2x6x1x1xf32, #tpu.memory_space<vmem>>, vector<1x6x1x1xf32>
    %24 = vector.shape_cast %23 : vector<1x6x1x1xf32> to vector<6x1x1xf32>
    %25 = vector.broadcast %24 : vector<6x1x1xf32> to vector<6x8x128xf32>
    %26 = arith.mulf %22, %25 : vector<6x8x128xf32>
    %cst = arith.constant dense<0.000000e+00> : vector<8x128xf32>
    %27 = vector.multi_reduction <add>, %26, %cst [0] : vector<6x8x128xf32> to vector<8x128xf32>
    %c0_19 = arith.constant 0 : index
    %c0_20 = arith.constant 0 : index
    %c0_21 = arith.constant 0 : index
    %28 = vector.load %arg5[%c0_19, %c0_20, %c0_21] : memref<2x1x1xf32, #tpu.memory_space<vmem>>, vector<1x1x1xf32>
    %29 = vector.shape_cast %28 : vector<1x1x1xf32> to vector<1x1xf32>
    %30 = vector.broadcast %29 : vector<1x1xf32> to vector<8x128xf32>
    %31 = arith.addf %27, %30 : vector<8x128xf32>
    %cst_22 = arith.constant 5.000000e-01 : f32
    %32 = vector.broadcast %cst_22 : f32 to vector<8x128xf32>
    %33 = arith.mulf %32, %31 : vector<8x128xf32>
    %34 = math.tanh %33 : vector<8x128xf32>
    %cst_23 = arith.constant 1.000000e+00 : f32
    %35 = vector.broadcast %cst_23 : f32 to vector<8x128xf32>
    %36 = arith.addf %34, %35 : vector<8x128xf32>
    %cst_24 = arith.constant 5.000000e-01 : f32
    %37 = vector.broadcast %cst_24 : f32 to vector<8x128xf32>
    %38 = arith.mulf %37, %36 : vector<8x128xf32>
    %c0_25 = arith.constant 0 : index
    %c0_26 = arith.constant 0 : index
    %c0_27 = arith.constant 0 : index
    %39 = vector.load %arg6[%c0_25, %c0_26, %c0_27] : memref<2x8x128xf32, #tpu.memory_space<vmem>>, vector<1x8x128xf32>
    %40 = vector.shape_cast %39 : vector<1x8x128xf32> to vector<8x128xf32>
    %41 = vector.shape_cast %38 : vector<8x128xf32> to vector<1x8x128xf32>
    tpu.vector_store %arg6[%c0_25, %c0_26, %c0_27], %41 {strides = array<i32>} : memref<2x8x128xf32, #tpu.memory_space<vmem>>, vector<1x8x128xf32>,
    %c1_28 = arith.constant 1 : index
    %c0_29 = arith.constant 0 : index
    %c0_30 = arith.constant 0 : index
    %c0_31 = arith.constant 0 : index
    %42 = vector.load %arg4[%c1_28, %c0_29, %c0_30, %c0_31] : memref<2x6x1x1xf32, #tpu.memory_space<vmem>>, vector<1x6x1x1xf32>
    %43 = vector.shape_cast %42 : vector<1x6x1x1xf32> to vector<6x1x1xf32>
    %44 = vector.broadcast %43 : vector<6x1x1xf32> to vector<6x8x128xf32>
    %45 = arith.mulf %22, %44 : vector<6x8x128xf32>
    %cst_32 = arith.constant dense<0.000000e+00> : vector<8x128xf32>
    %46 = vector.multi_reduction <add>, %45, %cst_32 [0] : vector<6x8x128xf32> to vector<8x128xf32>
    %c1_33 = arith.constant 1 : index
    %c0_34 = arith.constant 0 : index
    %c0_35 = arith.constant 0 : index
    %47 = vector.load %arg5[%c1_33, %c0_34, %c0_35] : memref<2x1x1xf32, #tpu.memory_space<vmem>>, vector<1x1x1xf32>
    %48 = vector.shape_cast %47 : vector<1x1x1xf32> to vector<1x1xf32>
    %49 = vector.broadcast %48 : vector<1x1xf32> to vector<8x128xf32>
    %50 = arith.addf %46, %49 : vector<8x128xf32>
    %cst_36 = arith.constant 5.000000e-01 : f32
    %51 = vector.broadcast %cst_36 : f32 to vector<8x128xf32>
    %52 = arith.mulf %51, %50 : vector<8x128xf32>
    %53 = math.tanh %52 : vector<8x128xf32>
    %cst_37 = arith.constant 1.000000e+00 : f32
    %54 = vector.broadcast %cst_37 : f32 to vector<8x128xf32>
    %55 = arith.addf %53, %54 : vector<8x128xf32>
    %cst_38 = arith.constant 5.000000e-01 : f32
    %56 = vector.broadcast %cst_38 : f32 to vector<8x128xf32>
    %57 = arith.mulf %56, %55 : vector<8x128xf32>
    %c1_39 = arith.constant 1 : index
    %c0_40 = arith.constant 0 : index
    %c0_41 = arith.constant 0 : index
    %58 = vector.load %arg6[%c1_39, %c0_40, %c0_41] : memref<2x8x128xf32, #tpu.memory_space<vmem>>, vector<1x8x128xf32>
    %59 = vector.shape_cast %58 : vector<1x8x128xf32> to vector<8x128xf32>
    %60 = vector.shape_cast %57 : vector<8x128xf32> to vector<1x8x128xf32>
    tpu.vector_store %arg6[%c1_39, %c0_40, %c0_41], %60 {strides = array<i32>} : memref<2x8x128xf32, #tpu.memory_space<vmem>>, vector<1x8x128xf32>,
    return
  }
  func.func @transform_0(%arg0: i32) -> (i32, i32, i32) {
    %c0_i32 = arith.constant 0 : i32
    %c0_i32_0 = arith.constant 0 : i32
    %c0_i32_1 = arith.constant 0 : i32
    return %c0_i32, %arg0, %c0_i32_0 : i32, i32, i32
  }
  func.func @transform_1(%arg0: i32) -> (i32, i32, i32, i32) {
    %c0_i32 = arith.constant 0 : i32
    %c0_i32_0 = arith.constant 0 : i32
    %c0_i32_1 = arith.constant 0 : i32
    %c0_i32_2 = arith.constant 0 : i32
    %c0_i32_3 = arith.constant 0 : i32
    return %c0_i32, %c0_i32_0, %c0_i32_1, %c0_i32_2 : i32, i32, i32, i32
  }
  func.func @transform_2(%arg0: i32) -> (i32, i32, i32) {
    %c0_i32 = arith.constant 0 : i32
    %c0_i32_0 = arith.constant 0 : i32
    %c0_i32_1 = arith.constant 0 : i32
    %c0_i32_2 = arith.constant 0 : i32
    return %c0_i32, %c0_i32_0, %c0_i32_1 : i32, i32, i32
  }
  func.func @transform_3(%arg0: i32) -> (i32, i32, i32, i32) {
    %c0_i32 = arith.constant 0 : i32
    %c0_i32_0 = arith.constant 0 : i32
    %c0_i32_1 = arith.constant 0 : i32
    %c0_i32_2 = arith.constant 0 : i32
    %c0_i32_3 = arith.constant 0 : i32
    return %c0_i32, %c0_i32_0, %c0_i32_1, %c0_i32_2 : i32, i32, i32, i32
  }
  func.func @transform_4(%arg0: i32) -> (i32, i32, i32) {
    %c0_i32 = arith.constant 0 : i32
    %c0_i32_0 = arith.constant 0 : i32
    %c0_i32_1 = arith.constant 0 : i32
    %c0_i32_2 = arith.constant 0 : i32
    return %c0_i32, %c0_i32_0, %c0_i32_1 : i32, i32, i32
  }
  func.func @transform_5(%arg0: i32) -> (i32, i32, i32) {
    %c0_i32 = arith.constant 0 : i32
    %c0_i32_0 = arith.constant 0 : i32
    %c0_i32_1 = arith.constant 0 : i32
    return %c0_i32, %arg0, %c0_i32_0 : i32, i32, i32
  }
}

</mosaic_0001>

<llo_original>
// kernel: rbfn_forward.1
$region0: #{rbfn_forward.1}
  #allocation0 [shape = 'u32[]', space=smem, size = 0x4, offset = 0x4, fixed_abs, tag = 'smem constant byte address 0x4 - core index']
  #allocation1 [shape = 'u32[144,128]{1,0:T(1,128)}', space=vmem, size = 0x12000, scoped, tag = 'internal scratch']
  %s0 = inlined_call_operand.vmem [shape: f32[2,8,128], index: 0, kind: input, shape index: {}]
  %s1 = inlined_call_operand.vmem [shape: f32[2,6,1,1], index: 1, kind: input, shape index: {}]
  %s2 = inlined_call_operand.vmem [shape: f32[6,1,1], index: 2, kind: input, shape index: {}]
  %s3 = inlined_call_operand.vmem [shape: f32[2,6,1,1], index: 3, kind: input, shape index: {}]
  %s4 = inlined_call_operand.vmem [shape: f32[2,1,1], index: 4, kind: input, shape index: {}]
  %s5 = inlined_call_operand.vmem [shape: f32[2,8,128], index: 5, kind: output, shape index: {}]
  %s6 = sld [smem:[#allocation0]]
  $region30: #{rbfn_forward.1} parent=0
    _
  %s8 = ssub.s32 1, %s6
  %s9 = scalar_select 0, %s8, %s6
  // Predicated region
  $region2: #{rbfn_forward.1} parent=0 // pred_check
    _
  $region3: #{rbfn_forward.1} parent=0 // pred_check_branch
    %11 = sbr.rel (0) target = $region5
  $region4: #{rbfn_forward.1} parent=0 // pred_region
    _
  $region5: #{rbfn_forward.1} parent=0 // pred_fallthru
    _
  // Predicated region
  $region6: #{rbfn_forward.1} parent=0 // pred_check
    _
  $region7: #{rbfn_forward.1} parent=0 // pred_check_branch
    %13 = sbr.rel (0) target = $region9
  $region8: #{rbfn_forward.1} parent=0 // pred_region
    _
  $region9: #{rbfn_forward.1} parent=0 // pred_fallthru
    _
  // Predicated region
  $region10: #{rbfn_forward.1} parent=0 // pred_check
    _
  $region11: #{rbfn_forward.1} parent=0 // pred_check_branch
    %15 = sbr.rel (0) target = $region13
  $region12: #{rbfn_forward.1} parent=0 // pred_region
    _
  $region13: #{rbfn_forward.1} parent=0 // pred_fallthru
    _
  // Predicated region
  $region14: #{rbfn_forward.1} parent=0 // pred_check
    _
  $region15: #{rbfn_forward.1} parent=0 // pred_check_branch
    %17 = sbr.rel (0) target = $region17
  $region16: #{rbfn_forward.1} parent=0 // pred_region
    _
  $region17: #{rbfn_forward.1} parent=0 // pred_fallthru
    _
  // Predicated region
  $region18: #{rbfn_forward.1} parent=0 // pred_check
    _
  $region19: #{rbfn_forward.1} parent=0 // pred_check_branch
    %19 = sbr.rel (0) target = $region21
  $region20: #{rbfn_forward.1} parent=0 // pred_region
    _
  $region21: #{rbfn_forward.1} parent=0 // pred_fallthru
    _
  %v20 = vld [vmem:[%s0] sm:$0xff]
  %v21 = vld [vmem:[%s1] sm:$0x1]
  %v22 = vld [vmem:[%s1 + $0x1] sm:$0x1]
  %v23 = vld [vmem:[%s1 + $0x2] sm:$0x1]
  %v24 = vld [vmem:[%s1 + $0x3] sm:$0x1]
  %v25 = vld [vmem:[%s1 + $0x4] sm:$0x1]
  %v26 = vld [vmem:[%s1 + $0x5] sm:$0x1]
  %v33 = vlaneseq
  %v34 = vshrl.u32 %v33, 7
  %v35 = vsub.s32 0, %v34
  %v36 = vrot.slane %v21, %v35
  %v37 = vlaneseq
  %v38 = vshrl.u32 %v37, 7
  %v39 = vsub.s32 0, %v38
  %v40 = vrot.slane %v22, %v39
  %v41 = vlaneseq
  %v42 = vshrl.u32 %v41, 7
  %v43 = vsub.s32 0, %v42
  %v44 = vrot.slane %v23, %v43
  %v45 = vlaneseq
  %v46 = vshrl.u32 %v45, 7
  %v47 = vsub.s32 0, %v46
  %v48 = vrot.slane %v24, %v47
  %v49 = vlaneseq
  %v50 = vshrl.u32 %v49, 7
  %v51 = vsub.s32 0, %v50
  %v52 = vrot.slane %v25, %v51
  %v53 = vlaneseq
  %v54 = vshrl.u32 %v53, 7
  %v55 = vsub.s32 0, %v54
  %v56 = vrot.slane %v26, %v55
  %57 = vset.pattern.permute.xlu0 0
  %58 = vperm.xlu0 %57, %v36
  %v59 = vpop.permute.xlu0 %58
  %61 = vset.pattern.permute.xlu0 0
  %62 = vperm.xlu0 %61, %v40
  %v63 = vpop.permute.xlu0 %62
  %65 = vset.pattern.permute.xlu0 0
  %66 = vperm.xlu0 %65, %v44
  %v67 = vpop.permute.xlu0 %66
  %69 = vset.pattern.permute.xlu0 0
  %70 = vperm.xlu0 %69, %v48
  %v71 = vpop.permute.xlu0 %70
  %73 = vset.pattern.permute.xlu0 0
  %74 = vperm.xlu0 %73, %v52
  %v75 = vpop.permute.xlu0 %74
  %77 = vset.pattern.permute.xlu0 0
  %78 = vperm.xlu0 %77, %v56
  %v79 = vpop.permute.xlu0 %78
  %v81 = vsub.f32 %v20, %v59
  %v82 = vsub.f32 %v20, %v63
  %v83 = vsub.f32 %v20, %v67
  %v84 = vsub.f32 %v20, %v71
  %v85 = vsub.f32 %v20, %v75
  %v86 = vsub.f32 %v20, %v79
  %v87 = vmul.f32 %v81, %v81
  %v88 = vmul.f32 %v82, %v82
  %v89 = vmul.f32 %v83, %v83
  %v90 = vmul.f32 %v84, %v84
  %v91 = vmul.f32 %v85, %v85
  %v92 = vmul.f32 %v86, %v86
  %s93 = scalar_lea.vmem %s0, 8
  %v94 = vld [vmem:[%s93] sm:$0xff]
  %s95 = scalar_lea.vmem %s1, 6
  %v96 = vld [vmem:[%s95] sm:$0x1]
  %v97 = vld [vmem:[%s95 + $0x1] sm:$0x1]
  %v98 = vld [vmem:[%s95 + $0x2] sm:$0x1]
  %v99 = vld [vmem:[%s95 + $0x3] sm:$0x1]
  %v100 = vld [vmem:[%s95 + $0x4] sm:$0x1]
  %v101 = vld [vmem:[%s95 + $0x5] sm:$0x1]
  %v108 = vlaneseq
  %v109 = vshrl.u32 %v108, 7
  %v110 = vsub.s32 0, %v109
  %v111 = vrot.slane %v96, %v110
  %v112 = vlaneseq
  %v113 = vshrl.u32 %v112, 7
  %v114 = vsub.s32 0, %v113
  %v115 = vrot.slane %v97, %v114
  %v116 = vlaneseq
  %v117 = vshrl.u32 %v116, 7
  %v118 = vsub.s32 0, %v117
  %v119 = vrot.slane %v98, %v118
  %v120 = vlaneseq
  %v121 = vshrl.u32 %v120, 7
  %v122 = vsub.s32 0, %v121
  %v123 = vrot.slane %v99, %v122
  %v124 = vlaneseq
  %v125 = vshrl.u32 %v124, 7
  %v126 = vsub.s32 0, %v125
  %v127 = vrot.slane %v100, %v126
  %v128 = vlaneseq
  %v129 = vshrl.u32 %v128, 7
  %v130 = vsub.s32 0, %v129
  %v131 = vrot.slane %v101, %v130
  %132 = vset.pattern.permute.xlu0 0
  %133 = vperm.xlu0 %132, %v111
  %v134 = vpop.permute.xlu0 %133
  %136 = vset.pattern.permute.xlu0 0
  %137 = vperm.xlu0 %136, %v115
  %v138 = vpop.permute.xlu0 %137
  %140 = vset.pattern.permute.xlu0 0
  %141 = vperm.xlu0 %140, %v119
  %v142 = vpop.permute.xlu0 %141
  %144 = vset.pattern.permute.xlu0 0
  %145 = vperm.xlu0 %144, %v123
  %v146 = vpop.permute.xlu0 %145
  %148 = vset.pattern.permute.xlu0 0
  %149 = vperm.xlu0 %148, %v127
  %v150 = vpop.permute.xlu0 %149
  %152 = vset.pattern.permute.xlu0 0
  %153 = vperm.xlu0 %152, %v131
  %v154 = vpop.permute.xlu0 %153
  %v156 = vsub.f32 %v94, %v134
  %v157 = vsub.f32 %v94, %v138
  %v158 = vsub.f32 %v94, %v142
  %v159 = vsub.f32 %v94, %v146
  %v160 = vsub.f32 %v94, %v150
  %v161 = vsub.f32 %v94, %v154
  %v162 = vmul.f32 %v156, %v156
  %v163 = vmul.f32 %v157, %v157
  %v164 = vmul.f32 %v158, %v158
  %v165 = vmul.f32 %v159, %v159
  %v166 = vmul.f32 %v160, %v160
  %v167 = vmul.f32 %v161, %v161
  %v168 = vadd.f32 %v87, %v162
  %v169 = vadd.f32 %v88, %v163
  %v170 = vadd.f32 %v89, %v164
  %v171 = vadd.f32 %v90, %v165
  %v172 = vadd.f32 %v91, %v166
  %v173 = vadd.f32 %v92, %v167
  %v174 = vld [vmem:[%s2] sm:$0x1]
  %v175 = vld [vmem:[%s2 + $0x1] sm:$0x1]
  %v176 = vld [vmem:[%s2 + $0x2] sm:$0x1]
  %v177 = vld [vmem:[%s2 + $0x3] sm:$0x1]
  %v178 = vld [vmem:[%s2 + $0x4] sm:$0x1]
  %v179 = vld [vmem:[%s2 + $0x5] sm:$0x1]
  %v186 = vlaneseq
  %v187 = vshrl.u32 %v186, 7
  %v188 = vsub.s32 0, %v187
  %v189 = vrot.slane %v174, %v188
  %v190 = vlaneseq
  %v191 = vshrl.u32 %v190, 7
  %v192 = vsub.s32 0, %v191
  %v193 = vrot.slane %v175, %v192
  %v194 = vlaneseq
  %v195 = vshrl.u32 %v194, 7
  %v196 = vsub.s32 0, %v195
  %v197 = vrot.slane %v176, %v196
  %v198 = vlaneseq
  %v199 = vshrl.u32 %v198, 7
  %v200 = vsub.s32 0, %v199
  %v201 = vrot.slane %v177, %v200
  %v202 = vlaneseq
  %v203 = vshrl.u32 %v202, 7
  %v204 = vsub.s32 0, %v203
  %v205 = vrot.slane %v178, %v204
  %v206 = vlaneseq
  %v207 = vshrl.u32 %v206, 7
  %v208 = vsub.s32 0, %v207
  %v209 = vrot.slane %v179, %v208
  %210 = vset.pattern.permute.xlu0 0
  %211 = vperm.xlu0 %210, %v189
  %v212 = vpop.permute.xlu0 %211
  %214 = vset.pattern.permute.xlu0 0
  %215 = vperm.xlu0 %214, %v193
  %v216 = vpop.permute.xlu0 %215
  %218 = vset.pattern.permute.xlu0 0
  %219 = vperm.xlu0 %218, %v197
  %v220 = vpop.permute.xlu0 %219
  %222 = vset.pattern.permute.xlu0 0
  %223 = vperm.xlu0 %222, %v201
  %v224 = vpop.permute.xlu0 %223
  %226 = vset.pattern.permute.xlu0 0
  %227 = vperm.xlu0 %226, %v205
  %v228 = vpop.permute.xlu0 %227
  %230 = vset.pattern.permute.xlu0 0
  %231 = vperm.xlu0 %230, %v209
  %v232 = vpop.permute.xlu0 %231
  %v234 = vmul.f32 %v168, %v212
  %v235 = vmul.f32 %v169, %v216
  %v236 = vmul.f32 %v170, %v220
  %v237 = vmul.f32 %v171, %v224
  %v238 = vmul.f32 %v172, %v228
  %v239 = vmul.f32 %v173, %v232
  %v240 = vmul.f32 %v234, 1.442695
  %v241 = vpow.pop %v240
  %v242 = vmul.f32 %v235, 1.442695
  %v243 = vpow.pop %v242
  %v244 = vmul.f32 %v236, 1.442695
  %v245 = vpow.pop %v244
  %v246 = vmul.f32 %v237, 1.442695
  %v247 = vpow.pop %v246
  %v248 = vmul.f32 %v238, 1.442695
  %v249 = vpow.pop %v248
  %v250 = vmul.f32 %v239, 1.442695
  %v251 = vpow.pop %v250
  %v252 = vld [vmem:[%s3] sm:$0x1]
  %v253 = vld [vmem:[%s3 + $0x1] sm:$0x1]
  %v254 = vld [vmem:[%s3 + $0x2] sm:$0x1]
  %v255 = vld [vmem:[%s3 + $0x3] sm:$0x1]
  %v256 = vld [vmem:[%s3 + $0x4] sm:$0x1]
  %v257 = vld [vmem:[%s3 + $0x5] sm:$0x1]
  %v264 = vlaneseq
  %v265 = vshrl.u32 %v264, 7
  %v266 = vsub.s32 0, %v265
  %v267 = vrot.slane %v252, %v266
  %v268 = vlaneseq
  %v269 = vshrl.u32 %v268, 7
  %v270 = vsub.s32 0, %v269
  %v271 = vrot.slane %v253, %v270
  %v272 = vlaneseq
  %v273 = vshrl.u32 %v272, 7
  %v274 = vsub.s32 0, %v273
  %v275 = vrot.slane %v254, %v274
  %v276 = vlaneseq
  %v277 = vshrl.u32 %v276, 7
  %v278 = vsub.s32 0, %v277
  %v279 = vrot.slane %v255, %v278
  %v280 = vlaneseq
  %v281 = vshrl.u32 %v280, 7
  %v282 = vsub.s32 0, %v281
  %v283 = vrot.slane %v256, %v282
  %v284 = vlaneseq
  %v285 = vshrl.u32 %v284, 7
  %v286 = vsub.s32 0, %v285
  %v287 = vrot.slane %v257, %v286
  %288 = vset.pattern.permute.xlu0 0
  %289 = vperm.xlu0 %288, %v267
  %v290 = vpop.permute.xlu0 %289
  %292 = vset.pattern.permute.xlu0 0
  %293 = vperm.xlu0 %292, %v271
  %v294 = vpop.permute.xlu0 %293
  %296 = vset.pattern.permute.xlu0 0
  %297 = vperm.xlu0 %296, %v275
  %v298 = vpop.permute.xlu0 %297
  %300 = vset.pattern.permute.xlu0 0
  %301 = vperm.xlu0 %300, %v279
  %v302 = vpop.permute.xlu0 %301
  %304 = vset.pattern.permute.xlu0 0
  %305 = vperm.xlu0 %304, %v283
  %v306 = vpop.permute.xlu0 %305
  %308 = vset.pattern.permute.xlu0 0
  %309 = vperm.xlu0 %308, %v287
  %v310 = vpop.permute.xlu0 %309
  %v312 = vmul.f32 %v241, %v290
  %v313 = vmul.f32 %v243, %v294
  %v314 = vmul.f32 %v245, %v298
  %v315 = vmul.f32 %v247, %v302
  %v316 = vmul.f32 %v249, %v306
  %v317 = vmul.f32 %v251, %v310
  %v318 = vadd.f32 %v312, %v313
  %v319 = vadd.f32 %v318, %v314
  %v320 = vadd.f32 %v319, %v315
  %v321 = vadd.f32 %v320, %v316
  %v322 = vadd.f32 %v321, %v317
  %v323 = vld [vmem:[%s4] sm:$0x1]
  %v325 = vlaneseq
  %v326 = vshrl.u32 %v325, 7
  %v327 = vsub.s32 0, %v326
  %v328 = vrot.slane %v323, %v327
  %329 = vset.pattern.permute.xlu0 0
  %330 = vperm.xlu0 %329, %v328
  %v331 = vpop.permute.xlu0 %330
  %v333 = vadd.f32 %v322, %v331
  %v334 = vmul.f32 %v333, 0.5
  %v335 = vtanh.pop %v334
  %v336 = vadd.f32 %v335, 1.0
  %v337 = vmul.f32 %v336, 0.5
  %338 = vst [vmem:[%s5] sm:$0xff] %v337
  %s339 = scalar_lea.vmem %s3, 6
  %v340 = vld [vmem:[%s339] sm:$0x1]
  %v341 = vld [vmem:[%s339 + $0x1] sm:$0x1]
  %v342 = vld [vmem:[%s339 + $0x2] sm:$0x1]
  %v343 = vld [vmem:[%s339 + $0x3] sm:$0x1]
  %v344 = vld [vmem:[%s339 + $0x4] sm:$0x1]
  %v345 = vld [vmem:[%s339 + $0x5] sm:$0x1]
  %v352 = vlaneseq
  %v353 = vshrl.u32 %v352, 7
  %v354 = vsub.s32 0, %v353
  %v355 = vrot.slane %v340, %v354
  %v356 = vlaneseq
  %v357 = vshrl.u32 %v356, 7
  %v358 = vsub.s32 0, %v357
  %v359 = vrot.slane %v341, %v358
  %v360 = vlaneseq
  %v361 = vshrl.u32 %v360, 7
  %v362 = vsub.s32 0, %v361
  %v363 = vrot.slane %v342, %v362
  %v364 = vlaneseq
  %v365 = vshrl.u32 %v364, 7
  %v366 = vsub.s32 0, %v365
  %v367 = vrot.slane %v343, %v366
  %v368 = vlaneseq
  %v369 = vshrl.u32 %v368, 7
  %v370 = vsub.s32 0, %v369
  %v371 = vrot.slane %v344, %v370
  %v372 = vlaneseq
  %v373 = vshrl.u32 %v372, 7
  %v374 = vsub.s32 0, %v373
  %v375 = vrot.slane %v345, %v374
  %376 = vset.pattern.permute.xlu0 0
  %377 = vperm.xlu0 %376, %v355
  %v378 = vpop.permute.xlu0 %377
  %380 = vset.pattern.permute.xlu0 0
  %381 = vperm.xlu0 %380, %v359
  %v382 = vpop.permute.xlu0 %381
  %384 = vset.pattern.permute.xlu0 0
  %385 = vperm.xlu0 %384, %v363
  %v386 = vpop.permute.xlu0 %385
  %388 = vset.pattern.permute.xlu0 0
  %389 = vperm.xlu0 %388, %v367
  %v390 = vpop.permute.xlu0 %389
  %392 = vset.pattern.permute.xlu0 0
  %393 = vperm.xlu0 %392, %v371
  %v394 = vpop.permute.xlu0 %393
  %396 = vset.pattern.permute.xlu0 0
  %397 = vperm.xlu0 %396, %v375
  %v398 = vpop.permute.xlu0 %397
  %v400 = vmul.f32 %v241, %v378
  %v401 = vmul.f32 %v243, %v382
  %v402 = vmul.f32 %v245, %v386
  %v403 = vmul.f32 %v247, %v390
  %v404 = vmul.f32 %v249, %v394
  %v405 = vmul.f32 %v251, %v398
  %v406 = vadd.f32 %v400, %v401
  %v407 = vadd.f32 %v406, %v402
  %v408 = vadd.f32 %v407, %v403
  %v409 = vadd.f32 %v408, %v404
  %v410 = vadd.f32 %v409, %v405
  %s411 = scalar_lea.vmem %s4, 1
  %v412 = vld [vmem:[%s411] sm:$0x1]
  %v414 = vlaneseq
  %v415 = vshrl.u32 %v414, 7
  %v416 = vsub.s32 0, %v415
  %v417 = vrot.slane %v412, %v416
  %418 = vset.pattern.permute.xlu0 0
  %419 = vperm.xlu0 %418, %v417
  %v420 = vpop.permute.xlu0 %419
  %v422 = vadd.f32 %v410, %v420
  %v423 = vmul.f32 %v422, 0.5
  %v424 = vtanh.pop %v423
  %v425 = vadd.f32 %v424, 1.0
  %v426 = vmul.f32 %v425, 0.5
  %s427 = scalar_lea.vmem %s5, 8
  %428 = vst [vmem:[%s427] sm:$0xff] %v426
  // Predicated region
  $region22: #{rbfn_forward.1} parent=0 // pred_check
    _
  $region23: #{rbfn_forward.1} parent=0 // pred_check_branch
    %430 = sbr.rel (0) target = $region25
  $region24: #{rbfn_forward.1} parent=0 // pred_region
    _
  $region25: #{rbfn_forward.1} parent=0 // pred_fallthru
    _
  // Predicated region
  $region26: #{rbfn_forward.1} parent=0 // pred_check
    _
  $region27: #{rbfn_forward.1} parent=0 // pred_check_branch
    %432 = sbr.rel (0) target = $region29
  $region28: #{rbfn_forward.1} parent=0 // pred_region
    _
  $region29: #{rbfn_forward.1} parent=0 // pred_fallthru
    _

</llo_original>
